<compile_context>
chip_gen: v5e
topology: v5e:2x2
jax: 0.10.0
libtpu: 0.0.40
codegen_flags: <defaults>
</compile_context>

<pallas_src>
import functools

import jax
import jax.numpy as jnp
from jax import lax
from jax.experimental import pallas as pl
from jax.experimental.pallas import tpu as pltpu

_CLAMP_LO = 0.0005
_CLAMP_HI = 0.9995
_NORM_EPS2 = 1e-24                      # F.normalize eps=1e-12, squared
_PIPELINE_BUDGET = 24 * 1024 * 1024     # VMEM for double-buffered blocks
_VMEM_LIMIT = 32 * 1024 * 1024          # explicit scoped limit, safe on v5e/v6e/v7x


def _round_up(x, m):
    return ((x + m - 1) // m) * m


def _simmin_block_kernel(bg_ref, fg_ref, t_ref, out_ref, *, block_rows,
                         n_rows, needs_mask):
    """Partial sum of the diagonal -log(1 - sim) terms for one row-block."""
    bg = bg_ref[...].astype(jnp.float32)            # (TR, d)
    fg = fg_ref[...].astype(jnp.float32)            # (TR, d)
    t = t_ref[...].astype(jnp.float32)              # (TR, 1)

    # Rowwise reductions over the lane (embedding) axis -> (TR, 1).
    s_dot = jnp.sum(bg * fg, axis=-1, keepdims=True)
    s_bg = jnp.sum(bg * bg, axis=-1, keepdims=True)
    s_fg = jnp.sum(fg * fg, axis=-1, keepdims=True)

    # F.normalize(t*x, eps=1e-12): 1/max(|t|*||x||, eps) == rsqrt(max(t^2*|x|^2, eps^2))
    t2 = t * t
    eps2 = jnp.float32(_NORM_EPS2)
    inv_den = lax.rsqrt(jnp.maximum(t2 * s_bg, eps2)) * lax.rsqrt(
        jnp.maximum(t2 * s_fg, eps2))
    sim = (t2 * s_dot) * inv_den                    # diagonal of bgN @ fgN^T
    sim = jnp.clip(sim, _CLAMP_LO, _CLAMP_HI)
    loss = -jnp.log(1.0 - sim)                      # (TR, 1)

    if needs_mask:
        # Ragged last block: rows >= n_rows are garbage reads; zero their loss
        # (jnp.where also blocks any NaN coming from garbage data).
        row0 = pl.program_id(0) * block_rows
        ridx = row0 + lax.broadcasted_iota(jnp.int32, loss.shape, 0)
        loss = jnp.where(ridx < n_rows, loss, jnp.float32(0.0))

    block_sum = jnp.sum(loss)                       # scalar partial sum
    # One full unmasked (8,128) vreg store; the wrapper reads [:, 0, 0].
    out_ref[...] = jnp.broadcast_to(block_sum, out_ref.shape)


def _pick_block_rows(m_rows, d, data_itemsize, tgt_itemsize):
    """Rows per grid step so double-buffered blocks fit the VMEM budget."""
    d_pad = _round_up(d, 128)                       # lane padding of data blocks
    # Per-row VMEM bytes of ONE pipeline buffer: 2 data blocks + lane-padded
    # (TR,1) target block.  The (1,8,128) output block is covered by the slack.
    row_bytes = 2 * d_pad * data_itemsize + 128 * tgt_itemsize
    per_buffer = _PIPELINE_BUDGET // 2 - 16 * 1024
    tr = max(32, (per_buffer // row_bytes) // 32 * 32)
    # Prefer >= ~8 grid steps on big problems so the "parallel" axis can
    # load-balance across v7x's two TensorCores.
    if m_rows >= 8 * 512:
        tr = min(tr, _round_up((m_rows + 7) // 8, 32))
    if tr >= m_rows:
        tr = m_rows                                 # full-extent block (always legal)
    return tr


def sim_min_loss(embedded_bg, embedded_fg, target, *, block_rows=None):
    """embedded_bg/fg: [bs, n, dim], target: [bs, n] -> scalar f32 loss."""
    bs, n, d = embedded_bg.shape
    M = bs * n

    bg2 = embedded_bg.reshape(M, d)                 # contiguous reshape: no HBM copy
    fg2 = embedded_fg.reshape(M, d)
    t2 = target.reshape(M, 1)                       # native dtype; cast per-tile in kernel

    d_isz = jnp.dtype(embedded_bg.dtype).itemsize
    t_isz = jnp.dtype(t2.dtype).itemsize
    if block_rows is None:
        tr = _pick_block_rows(M, d, d_isz, t_isz)
    else:
        tr = min(M, max(8, block_rows))
        if tr < M:
            tr = max(8, (tr // 8) * 8)

    num_blocks = (M + tr - 1) // tr
    needs_mask = (M % tr) != 0

    kernel = functools.partial(_simmin_block_kernel, block_rows=tr,
                               n_rows=M, needs_mask=needs_mask)

    per_block = pl.pallas_call(
        kernel,
        out_shape=jax.ShapeDtypeStruct((num_blocks, 8, 128), jnp.float32),
        grid=(num_blocks,),
        in_specs=[
            pl.BlockSpec((tr, d), lambda i: (i, 0)),   # embedded_bg rows
            pl.BlockSpec((tr, d), lambda i: (i, 0)),   # embedded_fg rows
            pl.BlockSpec((tr, 1), lambda i: (i, 0)),   # target rows
        ],
        out_specs=pl.BlockSpec((1, 8, 128), lambda i: (i, 0, 0)),
        compiler_params=pltpu.CompilerParams(
            dimension_semantics=("parallel",),
            vmem_limit_bytes=_VMEM_LIMIT,
        ),
        cost_estimate=pl.CostEstimate(
            flops=6 * M * d,
            transcendentals=3 * M,
            bytes_accessed=2 * M * d * d_isz + M * t_isz
            + num_blocks * 8 * 128 * 4,
        ),
    )(bg2, fg2, t2)

    diag_loss = jnp.sum(per_block[:, 0, 0])
    # Off-diagonal entries of sim*eye are exactly 0 -> clamped to _CLAMP_LO each.
    off_val = -jnp.log(jnp.float32(1.0) - jnp.float32(_CLAMP_LO))
    off_const = jnp.float32(bs * (n * n - n)) * off_val
    # Matches the PyTorch reference exactly (inf/nan if target.sum() == 0).
    return (diag_loss + off_const) / jnp.sum(target.astype(jnp.float32))


def _reference(embedded_bg, embedded_fg, target):
    t = target[..., None].astype(jnp.float32)
    bg = t * embedded_bg.astype(jnp.float32)
    fg = t * embedded_fg.astype(jnp.float32)

    def norm(x):
        return x / jnp.maximum(jnp.linalg.norm(x, axis=-1, keepdims=True), 1e-12)

    bg_n, fg_n = norm(bg), norm(fg)
    sim = jnp.einsum("bnd,bmd->bnm", bg_n, fg_n,
                     precision=lax.Precision.HIGHEST)
    nn = sim.shape[-1]
    sim = sim * jnp.eye(nn, dtype=sim.dtype)[None]
    sim = jnp.clip(sim, 0.0005, 0.9995)
    loss = -jnp.log(1.0 - sim)
    return jnp.sum(loss) / jnp.sum(t)


if __name__ == "__main__":
    key = jax.random.PRNGKey(0)
    ks = jax.random.split(key, 9)

    # Case 1: small shapes consistent with the module (batch=2, classes=8, dim=32),
    # auto tile -> single full-extent block, no masking.
    bs, n, dim = 2, 8, 32
    embedded_bg = jax.random.normal(ks[0], (bs, n, dim), dtype=jnp.float32)
    embedded_fg = jax.random.normal(ks[1], (bs, n, dim), dtype=jnp.float32)
    target = jax.random.bernoulli(ks[2], 0.5, (bs, n)).astype(jnp.float32)
    target = target.at[0, 0].set(1.0)  # guarantee target.sum() > 0

    out = jax.block_until_ready(sim_min_loss(embedded_bg, embedded_fg, target))
    ref = _reference(embedded_bg, embedded_fg, target)
    assert jnp.allclose(out, ref, rtol=1e-5, atol=1e-5), (out, ref)

    # Case 2: multi-block grid with a ragged last block (bs*n=30, block_rows=8)
    # -> exercises the in-kernel tail masking (no input padding).
    bs2, n2, dim2 = 3, 10, 32
    ebg2 = jax.random.normal(ks[3], (bs2, n2, dim2), dtype=jnp.float32)
    efg2 = jax.random.normal(ks[4], (bs2, n2, dim2), dtype=jnp.float32)
    tgt2 = jax.random.bernoulli(ks[5], 0.5, (bs2, n2)).astype(jnp.float32)
    tgt2 = tgt2.at[0, 0].set(1.0)

    out2 = jax.block_until_ready(sim_min_loss(ebg2, efg2, tgt2, block_rows=8))
    ref2 = _reference(ebg2, efg2, tgt2)
    assert jnp.allclose(out2, ref2, rtol=1e-5, atol=1e-5), (out2, ref2)

    # Case 3: bf16 embeddings, lane-exact d=128 -> exercises the native-dtype
    # pass-through (per-tile f32 upcast inside the kernel).
    bs3, n3, dim3 = 2, 8, 128
    ebg3 = jax.random.normal(ks[6], (bs3, n3, dim3), dtype=jnp.bfloat16)
    efg3 = jax.random.normal(ks[7], (bs3, n3, dim3), dtype=jnp.bfloat16)
    tgt3 = jax.random.bernoulli(ks[8], 0.5, (bs3, n3)).astype(jnp.float32)
    tgt3 = tgt3.at[0, 0].set(1.0)

    out3 = jax.block_until_ready(sim_min_loss(ebg3, efg3, tgt3))
    ref3 = _reference(ebg3, efg3, tgt3)
    assert jnp.allclose(out3, ref3, rtol=1e-5, atol=1e-5), (out3, ref3)

    print("KERNEL_OK")
</pallas_src>

<mosaic_0001>
module attributes {stable_mosaic.version = 11 : i64} {
  func.func @_simmin_block_kernel(%arg0: i32, %arg1: memref<16x32xf32, #tpu.memory_space<vmem>>, %arg2: memref<16x32xf32, #tpu.memory_space<vmem>>, %arg3: memref<16x1xf32, #tpu.memory_space<vmem>>, %arg4: memref<1x8x128xf32, #tpu.memory_space<vmem>>) attributes {dimension_semantics = [#tpu.dimension_semantics<parallel>], iteration_bounds = array<i64: 1>, scalar_prefetch = 0 : i64, scratch_operands = 0 : i64, tpu.core_type = #tpu.core_type<tc>, window_params = [{transform_indices = @transform_0, window_bounds = array<i64: 16, 32>}, {transform_indices = @transform_1, window_bounds = array<i64: 16, 32>}, {transform_indices = @transform_2, window_bounds = array<i64: 16, 1>}, {transform_indices = @transform_3, window_bounds = array<i64: 1, 8, 128>}]} {
    %c0 = arith.constant 0 : index
    %c0_0 = arith.constant 0 : index
    %0 = vector.load %arg1[%c0, %c0_0] : memref<16x32xf32, #tpu.memory_space<vmem>>, vector<16x32xf32>
    %c0_1 = arith.constant 0 : index
    %c0_2 = arith.constant 0 : index
    %1 = vector.load %arg2[%c0_1, %c0_2] : memref<16x32xf32, #tpu.memory_space<vmem>>, vector<16x32xf32>
    %c0_3 = arith.constant 0 : index
    %c0_4 = arith.constant 0 : index
    %2 = vector.load %arg3[%c0_3, %c0_4] : memref<16x1xf32, #tpu.memory_space<vmem>>, vector<16x1xf32>
    %3 = arith.mulf %0, %1 : vector<16x32xf32>
    %cst = arith.constant dense<0.000000e+00> : vector<16xf32>
    %4 = vector.multi_reduction <add>, %3, %cst [1] : vector<16x32xf32> to vector<16xf32>
    %5 = vector.shape_cast %4 : vector<16xf32> to vector<16x1xf32>
    %6 = arith.mulf %0, %0 : vector<16x32xf32>
    %cst_5 = arith.constant dense<0.000000e+00> : vector<16xf32>
    %7 = vector.multi_reduction <add>, %6, %cst_5 [1] : vector<16x32xf32> to vector<16xf32>
    %8 = vector.shape_cast %7 : vector<16xf32> to vector<16x1xf32>
    %9 = arith.mulf %1, %1 : vector<16x32xf32>
    %cst_6 = arith.constant dense<0.000000e+00> : vector<16xf32>
    %10 = vector.multi_reduction <add>, %9, %cst_6 [1] : vector<16x32xf32> to vector<16xf32>
    %11 = vector.shape_cast %10 : vector<16xf32> to vector<16x1xf32>
    %12 = arith.mulf %2, %2 : vector<16x1xf32>
    %13 = arith.mulf %12, %8 : vector<16x1xf32>
    %cst_7 = arith.constant 1.000000e-24 : f32
    %14 = vector.broadcast %cst_7 : f32 to vector<16x1xf32>
    %15 = arith.maximumf %13, %14 : vector<16x1xf32>
    %16 = math.rsqrt %15 : vector<16x1xf32>
    %17 = arith.mulf %12, %11 : vector<16x1xf32>
    %cst_8 = arith.constant 1.000000e-24 : f32
    %18 = vector.broadcast %cst_8 : f32 to vector<16x1xf32>
    %19 = arith.maximumf %17, %18 : vector<16x1xf32>
    %20 = math.rsqrt %19 : vector<16x1xf32>
    %21 = arith.mulf %16, %20 : vector<16x1xf32>
    %22 = arith.mulf %12, %5 : vector<16x1xf32>
    %23 = arith.mulf %22, %21 : vector<16x1xf32>
    %cst_9 = arith.constant 5.000000e-04 : f32
    %cst_10 = arith.constant 0.999499976 : f32
    %24 = vector.broadcast %cst_9 : f32 to vector<16x1xf32>
    %25 = arith.maximumf %24, %23 : vector<16x1xf32>
    %26 = vector.broadcast %cst_10 : f32 to vector<16x1xf32>
    %27 = arith.minimumf %26, %25 : vector<16x1xf32>
    %cst_11 = arith.constant 1.000000e+00 : f32
    %28 = vector.broadcast %cst_11 : f32 to vector<16x1xf32>
    %29 = arith.subf %28, %27 : vector<16x1xf32>
    %30 = math.log %29 : vector<16x1xf32>
    %cst_12 = arith.constant 0.000000e+00 : f32
    %31 = vector.broadcast %cst_12 : f32 to vector<16x1xf32>
    %32 = arith.subf %31, %30 : vector<16x1xf32>
    %33 = vector.shape_cast %32 : vector<16x1xf32> to vector<1x16x1xf32>
    %cst_13 = arith.constant dense<0.000000e+00> : vector<1xf32>
    %34 = vector.multi_reduction <add>, %33, %cst_13 [1, 2] : vector<1x16x1xf32> to vector<1xf32>
    %35 = vector.shape_cast %34 : vector<1xf32> to vector<1x1x1xf32>
    %36 = vector.extract %35[0, 0, 0] : f32 from vector<1x1x1xf32>
    %37 = vector.broadcast %36 : f32 to vector<1x8x128xf32>
    %c0_14 = arith.constant 0 : index
    %c0_15 = arith.constant 0 : index
    %c0_16 = arith.constant 0 : index
    %38 = vector.load %arg4[%c0_14, %c0_15, %c0_16] : memref<1x8x128xf32, #tpu.memory_space<vmem>>, vector<1x8x128xf32>
    tpu.vector_store %arg4[%c0_14, %c0_15, %c0_16], %37 {strides = array<i32>} : memref<1x8x128xf32, #tpu.memory_space<vmem>>, vector<1x8x128xf32>,
    return
  }
  func.func @transform_0(%arg0: i32) -> (i32, i32) {
    %c0_i32 = arith.constant 0 : i32
    %c0_i32_0 = arith.constant 0 : i32
    return %arg0, %c0_i32 : i32, i32
  }
  func.func @transform_1(%arg0: i32) -> (i32, i32) {
    %c0_i32 = arith.constant 0 : i32
    %c0_i32_0 = arith.constant 0 : i32
    return %arg0, %c0_i32 : i32, i32
  }
  func.func @transform_2(%arg0: i32) -> (i32, i32) {
    %c0_i32 = arith.constant 0 : i32
    %c0_i32_0 = arith.constant 0 : i32
    return %arg0, %c0_i32 : i32, i32
  }
  func.func @transform_3(%arg0: i32) -> (i32, i32, i32) {
    %c0_i32 = arith.constant 0 : i32
    %c0_i32_0 = arith.constant 0 : i32
    %c0_i32_1 = arith.constant 0 : i32
    return %arg0, %c0_i32, %c0_i32_0 : i32, i32, i32
  }
}

</mosaic_0001>

<llo_original>
// kernel: tpu_custom_call.1
$region0: #{tpu_custom_call.1}
  #allocation0 [shape = 'u32[]', space=smem, size = 0x4, offset = 0x4, fixed_abs, tag = 'smem constant byte address 0x4 - core index']
  #allocation1 [shape = 'u32[72,128]{1,0:T(1,128)}', space=vmem, size = 0x9000, scoped, tag = 'internal scratch']
  %s0 = inlined_call_operand.vmem [shape: f32[16,32], index: 0, kind: input, shape index: {}]
  %s1 = inlined_call_operand.hbm [shape: f32[16,32], index: 1, kind: input, shape index: {}]
  %s2 = inlined_call_operand.vmem [shape: f32[16,1], index: 2, kind: input, shape index: {}]
  %s3 = inlined_call_operand.hbm [shape: f32[1,8,128], index: 3, kind: output, shape index: {}]
  %s4 = sld [smem:[#allocation0]]
  $region26: #{tpu_custom_call.1} parent=0
    _
  %s6 = ssub.s32 1, %s4
  %s7 = scalar_select 0, %s6, %s4
  $region1: #{tpu_custom_call.1} parent=0
    #allocation2 [shape = 'u8[8192]{0}', space=vmem, size = 0x2000, scoped, tag = 'input window, operand 1, single buffered']
    #allocation3 [shape = 's32[1]{0}', space=sflag, size = 0x4, scoped, tag = 'scoped memory for tpu_custom_call.1']
    #allocation4 [shape = 's32[1]{0}', space=sflag, size = 0x4, scoped, tag = 'scoped memory for tpu_custom_call.1']
    #allocation5 [shape = 'u8[4096]{0}', space=vmem, size = 0x1000, scoped, tag = 'output window, operand 0, single buffered']
    %8 = vsyncpa [#allocation3], 0
    %9 = vsyncpa [#allocation4], 0
    // Predicated region
    $region2: #{tpu_custom_call.1} parent=1 // pred_check
      _
    $region3: #{tpu_custom_call.1} parent=1 // pred_check_branch
      %11 = sbr.rel (0) target = $region5
    $region4: #{tpu_custom_call.1} parent=1 // pred_region
      _
    $region5: #{tpu_custom_call.1} parent=1 // pred_fallthru
      _
    // Predicated region
    $region6: #{tpu_custom_call.1} parent=1 // pred_check
      _
    $region7: #{tpu_custom_call.1} parent=1 // pred_check_branch
      %13 = sbr.rel (0) target = $region9
    $region8: #{tpu_custom_call.1} parent=1 // pred_region
      %15 = vsyncadd [#allocation3], 0
      %s16 = sshll.u32 %s1, 4
      %s17 = int_to_ptr.hbm [resolvable:$true] %s16
      %s18 = sshll.u32 [#allocation2], 4
      %s19 = int_to_ptr.vmem [resolvable:$true] %s18
      %24 = dma.hbm_to_vmem [thread:$0]  %s17, 256, %s19, [#allocation3], 128, 128, 8
    $region9: #{tpu_custom_call.1} parent=1 // pred_fallthru
      _
    // Predicated region
    $region10: #{tpu_custom_call.1} parent=1 // pred_check
      _
    $region11: #{tpu_custom_call.1} parent=1 // pred_check_branch
      %26 = sbr.rel (0) target = $region13
    $region12: #{tpu_custom_call.1} parent=1 // pred_region
      _
    $region13: #{tpu_custom_call.1} parent=1 // pred_fallthru
      _
    // Predicated region
    $region14: #{tpu_custom_call.1} parent=1 // pred_check
      _
    $region15: #{tpu_custom_call.1} parent=1 // pred_check_branch
      %28 = sbr.rel (0) target = $region17
    $region16: #{tpu_custom_call.1} parent=1 // pred_region
      %30 = dma.done [#allocation3], 256
    $region17: #{tpu_custom_call.1} parent=1 // pred_fallthru
      _
    %v31 = vld [vmem:[%s0] sm:$0xff]
    %v32 = vld [vmem:[%s0 + $0x8] sm:$0xff]
    %v33 = vld [vmem:[#allocation2] sm:$0xff]
    %v34 = vld [vmem:[#allocation2 + $0x8] sm:$0xff]
    %v35 = vld [vmem:[%s2] sm:$0xff]
    %v36 = vld [vmem:[%s2 + $0x8] sm:$0xff]
    %v37 = vmul.f32 %v31, %v33
    %v38 = vmul.f32 %v32, %v34
    %vm39 = vcmask 261120
    %v40 = vsel %vm39, %v37, 0.0
    %41 = vadd.xlane.f32.xlu0 %v40
    %v42 = vpop.xlane.xlu0 %41
    %v43 = vsel %vm39, %v38, 0.0
    %44 = vadd.xlane.f32.xlu0 %v43
    %v45 = vpop.xlane.xlu0 %44
    %v46 = vmul.f32 %v31, %v31
    %v47 = vmul.f32 %v32, %v32
    %v48 = vsel %vm39, %v46, 0.0
    %49 = vadd.xlane.f32.xlu0 %v48
    %v50 = vpop.xlane.xlu0 %49
    %v51 = vsel %vm39, %v47, 0.0
    %52 = vadd.xlane.f32.xlu0 %v51
    %v53 = vpop.xlane.xlu0 %52
    %v54 = vmul.f32 %v33, %v33
    %v55 = vmul.f32 %v34, %v34
    %v56 = vsel %vm39, %v54, 0.0
    %57 = vadd.xlane.f32.xlu0 %v56
    %v58 = vpop.xlane.xlu0 %57
    %v59 = vsel %vm39, %v55, 0.0
    %60 = vadd.xlane.f32.xlu0 %v59
    %v61 = vpop.xlane.xlu0 %60
    %v62 = vmul.f32 %v35, %v35
    %v63 = vmul.f32 %v36, %v36
    %v64 = vmul.f32 %v62, %v50
    %v65 = vmul.f32 %v63, %v53
    %v66 = vmax.f32 %v64, 1e-24
    %v67 = vmax.f32 %v65, 1e-24
    %v68 = vrsqrt.pop %v66
    %v69 = vmul.f32 %v68, %v66
    %v70 = vmul.f32 %v69, %v68
    %v71 = vmul.f32 0.5, %v70
    %v72 = vsub.f32 1.5, %v71
    %v73 = vmul.f32 %v68, %v72
    %vm74 = vweird.f32 %v66
    %vm75 = vweird.f32 %v68
    %vm76 = vmor %vm74, %vm75
    %v77 = vsel %vm76, %v68, %v73
    %v78 = vrsqrt.pop %v67
    %v79 = vmul.f32 %v78, %v67
    %v80 = vmul.f32 %v79, %v78
    %v81 = vmul.f32 0.5, %v80
    %v82 = vsub.f32 1.5, %v81
    %v83 = vmul.f32 %v78, %v82
    %vm84 = vweird.f32 %v67
    %vm85 = vweird.f32 %v78
    %vm86 = vmor %vm84, %vm85
    %v87 = vsel %vm86, %v78, %v83
    %v88 = vmul.f32 %v62, %v58
    %v89 = vmul.f32 %v63, %v61
    %v90 = vmax.f32 %v88, 1e-24
    %v91 = vmax.f32 %v89, 1e-24
    %v92 = vrsqrt.pop %v90
    %v93 = vmul.f32 %v92, %v90
    %v94 = vmul.f32 %v93, %v92
    %v95 = vmul.f32 0.5, %v94
    %v96 = vsub.f32 1.5, %v95
    %v97 = vmul.f32 %v92, %v96
    %vm98 = vweird.f32 %v90
    %vm99 = vweird.f32 %v92
    %vm100 = vmor %vm98, %vm99
    %v101 = vsel %vm100, %v92, %v97
    %v102 = vrsqrt.pop %v91
    %v103 = vmul.f32 %v102, %v91
    %v104 = vmul.f32 %v103, %v102
    %v105 = vmul.f32 0.5, %v104
    %v106 = vsub.f32 1.5, %v105
    %v107 = vmul.f32 %v102, %v106
    %vm108 = vweird.f32 %v91
    %vm109 = vweird.f32 %v102
    %vm110 = vmor %vm108, %vm109
    %v111 = vsel %vm110, %v102, %v107
    %v112 = vmul.f32 %v77, %v101
    %v113 = vmul.f32 %v87, %v111
    %v114 = vmul.f32 %v62, %v42
    %v115 = vmul.f32 %v63, %v45
    %v116 = vmul.f32 %v114, %v112
    %v117 = vmul.f32 %v115, %v113
    %v118 = vmax.f32 %v116, 0.0005
    %v119 = vmax.f32 %v117, 0.0005
    %v120 = vmin.f32 %v118, 0.9995
    %v121 = vmin.f32 %v119, 0.9995
    %v122 = vsub.f32 1.0, %v120
    %v123 = vsub.f32 1.0, %v121
    %v124 = vlog2.pop %v122
    %v125 = vmul.f32 %v124, 0.6931472
    %v126 = vlog2.pop %v123
    %v127 = vmul.f32 %v126, 0.6931472
    %v128 = vsub.f32 0.0, %v125
    %v129 = vsub.f32 0.0, %v127
    %vm130 = vcmask 7168
    %v131 = vsel %vm130, %v128, 0.0
    %v132 = vsel %vm130, %v129, 0.0
    %v133 = vadd.f32 %v131, %v132
    %134 = vadd.xlane.f32.xlu0 %v133
    %v135 = vpop.xlane.xlu0 %134
    %v136 = vrot.slane %v135, 4
    %v137 = vadd.f32 %v135, %v136
    %v138 = vrot.slane %v137, 2
    %v139 = vadd.f32 %v137, %v138
    %v140 = vrot.slane %v139, 1
    %v141 = vadd.f32 %v139, %v140
    %s142 = vtos %v141
    %v143 = vstv %s142
    %144 = vst [vmem:[#allocation5] sm:$0xff] %v143
    // Predicated region
    $region18: #{tpu_custom_call.1} parent=1 // pred_check
      _
    $region19: #{tpu_custom_call.1} parent=1 // pred_check_branch
      %146 = sbr.rel (0) target = $region21
    $region20: #{tpu_custom_call.1} parent=1 // pred_region
      %148 = vsyncadd [#allocation4], 0
      %s150 = sshll.u32 [#allocation5], 4
      %s151 = int_to_ptr.vmem [resolvable:$true] %s150
      %s152 = sshll.u32 %s3, 4
      %s153 = int_to_ptr.hbm [resolvable:$true] %s152
      %155 = dma.vmem_to_hbm [thread:$0]  %s151, 128, %s153, [#allocation4]
    $region21: #{tpu_custom_call.1} parent=1 // pred_fallthru
      _
    // Predicated region
    $region22: #{tpu_custom_call.1} parent=1 // pred_check
      _
    $region23: #{tpu_custom_call.1} parent=1 // pred_check_branch
      %157 = sbr.rel (0) target = $region25
    $region24: #{tpu_custom_call.1} parent=1 // pred_region
      %159 = dma.done [#allocation4], 128
    $region25: #{tpu_custom_call.1} parent=1 // pred_fallthru
      _
    %160 = vsyncpa [#allocation3], 1
    %161 = vsyncpa [#allocation4], 1

</llo_original>
